<compile_context>
chip_gen: v6e
topology: v6e:2x2x1
jax: 0.10.0
libtpu: 0.0.40
codegen_flags: <defaults>
</compile_context>

<pallas_src>
import functools
import math

import jax
import jax.numpy as jnp
from jax.experimental import pallas as pl
from jax.experimental.pallas import tpu as pltpu

_EPS = 1e-5


def _vmem_capacity_bytes():
    try:
        cap = int(pltpu.get_tpu_info().vmem_capacity_bytes)
        if cap > 0:
            return cap
    except Exception:
        pass
    return 64 << 20  # conservative default: v7x per-TensorCore VMEM


def _ln_rows_kernel(x_ref, w_ref, o_ref, *, d):
    """One normalization group per row (aligned / fallback path). Two-pass var in f32."""
    x = x_ref[...].astype(jnp.float32)
    w = w_ref[...]
    inv_d = jnp.float32(1.0 / d)
    mean = jnp.sum(x, axis=-1, keepdims=True) * inv_d
    xc = x - mean
    var = jnp.sum(xc * xc, axis=-1, keepdims=True) * inv_d      # unbiased=False
    inv = jax.lax.rsqrt(var + _EPS)
    # NOTE: output uses x, not (x - mean) -- BiasFree LN does not re-center.
    o_ref[...] = (x * inv * w).astype(o_ref.dtype)


def _ln_packed_kernel(x_ref, w_ref, seg_ref, segt_ref, o_ref, *, d):
    """x_ref/o_ref: (T, g*d) -- g original rows packed per lane-dense row.
    seg (g*d, g) / seg_t (g, g*d) are 0/1 matrices precomputed in the wrapper.
    Per-original-row stats via one HIGHEST-precision MXU dot (exact vs 0/1)."""
    x = x_ref[...].astype(jnp.float32)
    w = w_ref[...]
    seg = seg_ref[...]
    seg_t = segt_ref[...]
    inv_d = jnp.float32(1.0 / d)
    t = x.shape[0]

    dot = functools.partial(jnp.dot, precision=jax.lax.Precision.HIGHEST,
                            preferred_element_type=jnp.float32)
    # Single MXU pass for both sum and sum-of-squares (stacked along sublanes).
    s12 = dot(jnp.concatenate([x, x * x], axis=0), seg)          # (2T, g)
    s1, s2 = s12[:t], s12[t:]
    mean = s1 * inv_d
    var = jnp.maximum(s2 * inv_d - mean * mean, 0.0)             # clamp fp cancellation
    inv = jax.lax.rsqrt(var + _EPS)                              # (T, g)
    inv_full = dot(inv, seg_t)                                   # (T, g*d) lane-dense bcast
    o_ref[...] = (x * inv_full * w).astype(o_ref.dtype)


def layer_norm_without_shape(x, weight, *, target_steps=8, max_row_tile=8192):
    """BiasFree LayerNorm over the last dim. x: (..., D), weight: (D,). Same shape/dtype out."""
    orig_shape = x.shape
    D = int(orig_shape[-1])
    rows = int(math.prod(orig_shape[:-1])) if len(orig_shape) > 1 else 1
    itemsize = jnp.dtype(x.dtype).itemsize
    w32 = weight.astype(jnp.float32).reshape(1, D)

    # Lane packing factor: fold g consecutive rows into one lane-dense row of width
    # g*D (a multiple of 128).  Only used when it requires no padding copy and the
    # packed width stays sane (g <= 16, i.e. D % 8 == 0).
    g = 128 // math.gcd(D, 128)
    packed = (g > 1) and (rows % g == 0) and (g <= 16)
    # TODO(synk): for awkward D (odd dims / ragged row counts) we fall back to a
    # lane-sparse masked-store path instead of packing, trading some store
    # bandwidth for zero extra HBM copies.

    vmem_cap = _vmem_capacity_bytes()
    vmem_budget = int(0.4 * vmem_cap)              # working-set budget for tile sizing

    if packed:
        R, W = rows // g, g * D
        x2 = x.reshape(R, W)                       # contiguous -> free reshape, no copy
        wfull = jnp.tile(w32.reshape(-1), g).reshape(1, W)
        seg = jnp.repeat(jnp.eye(g, dtype=jnp.float32), D, axis=0)   # (W, g)
        seg_t = seg.T                                                 # (g, W)
        bytes_per_row = W * (4 * itemsize + 24)    # dbl-buffered in/out + f32 temps
    else:
        R, W = rows, D
        x2 = x.reshape(R, W)
        wfull = w32
        bytes_per_row = W * (4 * itemsize + 16)

    # Row tile: big enough to amortize the ~0.35us per-grid-step overhead, small
    # enough to (a) fit the VMEM budget and (b) leave ~target_steps grid steps so
    # both v7x TensorCores get work and prologue/epilogue DMAs overlap compute.
    if R <= 8:
        row_tile = R                               # block == full dim is always legal
    else:
        cap_vmem = max(8, vmem_budget // max(1, bytes_per_row))
        ideal = max(8, -(-R // target_steps))
        row_tile = min(ideal, cap_vmem, max_row_tile)
        row_tile = max(8, (row_tile // 8) * 8)

    grid = (pl.cdiv(R, row_tile),)                 # ragged tail: Pallas masks the last block
    need = row_tile * bytes_per_row + (2 << 20)    # + weight/seg constant buffers
    vmem_limit = int(min(int(0.75 * vmem_cap), max(32 << 20, int(1.5 * need))))

    if packed:
        kernel = functools.partial(_ln_packed_kernel, d=D)
        in_specs = [
            pl.BlockSpec((row_tile, W), lambda i: (i, 0)),   # x tile (lane-dense)
            pl.BlockSpec((1, W), lambda i: (0, 0)),          # weight, fetched once
            pl.BlockSpec((W, g), lambda i: (0, 0)),          # seg, fetched once
            pl.BlockSpec((g, W), lambda i: (0, 0)),          # seg_t, fetched once
        ]
        args = (x2, wfull, seg, seg_t)
    else:
        kernel = functools.partial(_ln_rows_kernel, d=D)
        in_specs = [
            pl.BlockSpec((row_tile, W), lambda i: (i, 0)),
            pl.BlockSpec((1, W), lambda i: (0, 0)),
        ]
        args = (x2, wfull)

    out = pl.pallas_call(
        kernel,
        out_shape=jax.ShapeDtypeStruct((R, W), x.dtype),
        grid_spec=pltpu.PrefetchScalarGridSpec(
            num_scalar_prefetch=0,
            grid=grid,
            in_specs=in_specs,
            out_specs=pl.BlockSpec((row_tile, W), lambda i: (i, 0)),
        ),
        compiler_params=pltpu.CompilerParams(
            dimension_semantics=("parallel",),     # shards the row axis across TCs
            vmem_limit_bytes=vmem_limit,
        ),
    )(*args)

    return out.reshape(orig_shape)


if __name__ == "__main__":
    key = jax.random.PRNGKey(0)
    k1, k2, k3, k4 = jax.random.split(key, 4)

    def _reference(x, w):
        x32 = x.astype(jnp.float32)
        mean = jnp.mean(x32, axis=-1, keepdims=True)
        var = jnp.mean((x32 - mean) ** 2, axis=-1, keepdims=True)   # unbiased=False
        return (x32 / jnp.sqrt(var + _EPS) * w.astype(jnp.float32)).astype(x.dtype)

    # Case 1: module-like 4-D input (B, C, H, W=dim) with small dim -> packed path (g=8).
    x1 = jax.random.normal(k1, (2, 4, 16, 16), dtype=jnp.float32)
    w1 = jnp.ones((16,), dtype=jnp.float32)                          # nn.Parameter(torch.ones(dim))
    out1 = jax.block_until_ready(layer_norm_without_shape(x1, w1))
    assert out1.shape == x1.shape and out1.dtype == x1.dtype
    assert jnp.allclose(out1, _reference(x1, w1), atol=1e-4, rtol=1e-4)

    # Case 2: lane-aligned dim (g == 1 path), multi-step grid.
    x2 = jax.random.normal(k2, (2, 8, 128), dtype=jnp.float32)
    w2 = 1.0 + 0.1 * jax.random.normal(k3, (128,), dtype=jnp.float32)
    out2 = jax.block_until_ready(layer_norm_without_shape(x2, w2))
    assert jnp.allclose(out2, _reference(x2, w2), atol=1e-4, rtol=1e-4)

    # Case 3: packed path with ragged packed-row count (last block partially OOB, masked).
    x3 = jax.random.normal(k4, (2, 44, 32), dtype=jnp.float32)       # rows=88, g=4, R=22
    w3 = jnp.linspace(0.5, 1.5, 32, dtype=jnp.float32)
    out3 = jax.block_until_ready(layer_norm_without_shape(x3, w3))
    assert jnp.allclose(out3, _reference(x3, w3), atol=1e-4, rtol=1e-4)

    # Case 4: rows not divisible by g -> unpacked fallback (no pad/slice copies).
    x4 = jax.random.normal(k1, (3, 7, 48), dtype=jnp.float32)
    w4 = jnp.linspace(0.5, 1.5, 48, dtype=jnp.float32)
    out4 = jax.block_until_ready(layer_norm_without_shape(x4, w4))
    assert jnp.allclose(out4, _reference(x4, w4), atol=1e-4, rtol=1e-4)

    print("KERNEL_OK")
</pallas_src>

<mosaic_0001>
module attributes {stable_mosaic.version = 11 : i64} {
  func.func @_ln_packed_kernel(%arg0: i32, %arg1: memref<8x128xf32, #tpu.memory_space<vmem>>, %arg2: memref<1x128xf32, #tpu.memory_space<vmem>>, %arg3: memref<128x8xf32, #tpu.memory_space<vmem>>, %arg4: memref<8x128xf32, #tpu.memory_space<vmem>>, %arg5: memref<8x128xf32, #tpu.memory_space<vmem>>) attributes {dimension_semantics = [#tpu.dimension_semantics<parallel>], iteration_bounds = array<i64: 2>, scalar_prefetch = 0 : i64, scratch_operands = 0 : i64, tpu.core_type = #tpu.core_type<tc>, window_params = [{transform_indices = @transform_0, window_bounds = array<i64: 8, 128>}, {pipeline_mode = #tpu.pipeline_mode<synchronous>, transform_indices = @transform_1, window_bounds = array<i64: 1, 128>}, {pipeline_mode = #tpu.pipeline_mode<synchronous>, transform_indices = @transform_2, window_bounds = array<i64: 128, 8>}, {pipeline_mode = #tpu.pipeline_mode<synchronous>, transform_indices = @transform_3, window_bounds = array<i64: 8, 128>}, {transform_indices = @transform_4, window_bounds = array<i64: 8, 128>}]} {
    %c0 = arith.constant 0 : index
    %c0_0 = arith.constant 0 : index
    %0 = vector.load %arg1[%c0, %c0_0] : memref<8x128xf32, #tpu.memory_space<vmem>>, vector<8x128xf32>
    %c0_1 = arith.constant 0 : index
    %c0_2 = arith.constant 0 : index
    %1 = vector.load %arg2[%c0_1, %c0_2] : memref<1x128xf32, #tpu.memory_space<vmem>>, vector<1x128xf32>
    %c0_3 = arith.constant 0 : index
    %c0_4 = arith.constant 0 : index
    %2 = vector.load %arg3[%c0_3, %c0_4] : memref<128x8xf32, #tpu.memory_space<vmem>>, vector<128x8xf32>
    %c0_5 = arith.constant 0 : index
    %c0_6 = arith.constant 0 : index
    %3 = vector.load %arg4[%c0_5, %c0_6] : memref<8x128xf32, #tpu.memory_space<vmem>>, vector<8x128xf32>
    %4 = arith.mulf %0, %0 : vector<8x128xf32>
    %5 = tpu.concatenate %0, %4 in 0 : vector<8x128xf32>, vector<8x128xf32> -> vector<16x128xf32>
    %cst = arith.constant dense<0.000000e+00> : vector<16x8xf32>
    %6 = tpu.matmul %5, %2, %cst {dimension_numbers = #tpu.dot_dimension_numbers<[1], [0], [0], [1], [0, 0, 1, 1], [], []>, precision = #tpu.contract_precision<fp32>} : vector<16x128xf32>, vector<128x8xf32>, vector<16x8xf32> -> vector<16x8xf32>
    %7 = vector.extract_strided_slice %6 {offsets = [0, 0], sizes = [8, 8], strides = [1, 1]} : vector<16x8xf32> to vector<8x8xf32>
    %8 = vector.extract_strided_slice %6 {offsets = [8, 0], sizes = [8, 8], strides = [1, 1]} : vector<16x8xf32> to vector<8x8xf32>
    %cst_7 = arith.constant 6.250000e-02 : f32
    %9 = vector.broadcast %cst_7 : f32 to vector<8x8xf32>
    %10 = arith.mulf %7, %9 : vector<8x8xf32>
    %cst_8 = arith.constant 6.250000e-02 : f32
    %11 = vector.broadcast %cst_8 : f32 to vector<8x8xf32>
    %12 = arith.mulf %8, %11 : vector<8x8xf32>
    %13 = arith.mulf %10, %10 : vector<8x8xf32>
    %14 = arith.subf %12, %13 : vector<8x8xf32>
    %cst_9 = arith.constant 0.000000e+00 : f32
    %15 = vector.broadcast %cst_9 : f32 to vector<8x8xf32>
    %16 = arith.maximumf %14, %15 : vector<8x8xf32>
    %cst_10 = arith.constant 9.99999974E-6 : f32
    %17 = vector.broadcast %cst_10 : f32 to vector<8x8xf32>
    %18 = arith.addf %16, %17 : vector<8x8xf32>
    %19 = math.rsqrt %18 : vector<8x8xf32>
    %cst_11 = arith.constant dense<0.000000e+00> : vector<8x128xf32>
    %20 = tpu.matmul %19, %3, %cst_11 {dimension_numbers = #tpu.dot_dimension_numbers<[1], [0], [0], [1], [0, 0, 1, 1], [], []>, precision = #tpu.contract_precision<fp32>} : vector<8x8xf32>, vector<8x128xf32>, vector<8x128xf32> -> vector<8x128xf32>
    %21 = arith.mulf %0, %20 : vector<8x128xf32>
    %22 = vector.broadcast %1 : vector<1x128xf32> to vector<8x128xf32>
    %23 = arith.mulf %21, %22 : vector<8x128xf32>
    %c0_12 = arith.constant 0 : index
    %c0_13 = arith.constant 0 : index
    %24 = vector.load %arg5[%c0_12, %c0_13] : memref<8x128xf32, #tpu.memory_space<vmem>>, vector<8x128xf32>
    tpu.vector_store %arg5[%c0_12, %c0_13], %23 {strides = array<i32>} : memref<8x128xf32, #tpu.memory_space<vmem>>, vector<8x128xf32>,
    return
  }
  func.func @transform_0(%arg0: i32) -> (i32, i32) {
    %c0_i32 = arith.constant 0 : i32
    %c0_i32_0 = arith.constant 0 : i32
    return %arg0, %c0_i32 : i32, i32
  }
  func.func @transform_1(%arg0: i32) -> (i32, i32) {
    %c0_i32 = arith.constant 0 : i32
    %c0_i32_0 = arith.constant 0 : i32
    %c0_i32_1 = arith.constant 0 : i32
    return %c0_i32, %c0_i32_0 : i32, i32
  }
  func.func @transform_2(%arg0: i32) -> (i32, i32) {
    %c0_i32 = arith.constant 0 : i32
    %c0_i32_0 = arith.constant 0 : i32
    %c0_i32_1 = arith.constant 0 : i32
    return %c0_i32, %c0_i32_0 : i32, i32
  }
  func.func @transform_3(%arg0: i32) -> (i32, i32) {
    %c0_i32 = arith.constant 0 : i32
    %c0_i32_0 = arith.constant 0 : i32
    %c0_i32_1 = arith.constant 0 : i32
    return %c0_i32, %c0_i32_0 : i32, i32
  }
  func.func @transform_4(%arg0: i32) -> (i32, i32) {
    %c0_i32 = arith.constant 0 : i32
    %c0_i32_0 = arith.constant 0 : i32
    return %arg0, %c0_i32 : i32, i32
  }
}

</mosaic_0001>

<llo_original>
// kernel: tpu_custom_call.1
$region0: #{tpu_custom_call.1}
  #allocation0 [shape = 'u32[]', space=smem, size = 0x4, offset = 0x4, fixed_abs, tag = 'smem constant byte address 0x4 - core index']
  #allocation1 [shape = 'u32[144,128]{1,0:T(1,128)}', space=vmem, size = 0x12000, scoped, tag = 'internal scratch']
  %s0 = inlined_call_operand.vmem [shape: f32[16,128], index: 0, kind: input, shape index: {}]
  %s1 = inlined_call_operand.vmem [shape: f32[1,128], index: 1, kind: input, shape index: {}]
  %s2 = inlined_call_operand.vmem [shape: f32[128,8], index: 2, kind: input, shape index: {}]
  %s3 = inlined_call_operand.vmem [shape: f32[8,128], index: 3, kind: input, shape index: {}]
  %s4 = inlined_call_operand.hbm [shape: f32[16,128], index: 4, kind: output, shape index: {}]
  %s5 = sld [smem:[#allocation0]]
  $region49: #{tpu_custom_call.1} parent=0
    _
  %s7 = ssub.s32 1, %s5
  %s8 = scalar_select 0, %s7, %s5
  $region1: #{tpu_custom_call.1} parent=0
    #allocation2 [shape = 'u8[8192]{0}', space=vmem, size = 0x2000, scoped, tag = 'output window, operand 0']
    #allocation3 [shape = 's32[2]{0}', space=sflag, size = 0x8, scoped, tag = 'scoped memory for tpu_custom_call.1']
    %9 = vsyncpa [#allocation3], 0
    %s10 = scalar_lea.sflag [#allocation3], 1
    %11 = vsyncpa %s10, 0
    loop: start=0, step=1, limit=4
    $region2: #{tpu_custom_call.1} parent=1 // loop_pre_header
      _
    $region3: #{tpu_custom_call.1} parent=1 // loop_header
      %s13 = sphi 0, %s17
      %p14 = scmp.ge.s32.totalorder %s13, 4
      %s23 = sphi 0, %s25
      %s26 = sphi 0, %s23
      %s27 = sphi 0, %s26
      %s43 = sphi 0, %s27
      %s47 = sphi 0, %s47
      %s49 = sphi 0, %s47
      %s50 = sphi 0, %s49
      %s64 = sphi 0, %s50
      %s68 = sphi 0, %s68
      %s70 = sphi 0, %s68
      %s71 = sphi 0, %s70
      %s85 = sphi 0, %s71
      %s89 = sphi 0, %s89
      %s91 = sphi 0, %s89
      %s92 = sphi 0, %s91
      %s106 = sphi 0, %s92
      %s112 = sphi 0, %s114
      %s115 = sphi 0, %s112
      %s116 = sphi 0, %s115
      %s132 = sphi 0, %s116
    $region4: #{tpu_custom_call.1} parent=1 // loop_header_branch
      %16 = sbr.rel (%p14) target = $region8
    $region5: #{tpu_custom_call.1} parent=1 // loop_body
      %s18 = ssub.s32 %s13, 1
      %s19 = ssub.s32 %s13, 2
      %s20 = sadd.s32 %s13, 1
      %s21 = ssub.s32 %s13, %s20
      %p22 = scmp.eq.s32.totalorder %s21, 0
      %s24 = sadd.s32 %s23, 1
      %s25 = scalar_select %p22, %s23, %s24
      %p28 = pneg %p22
      %p29 = scmp.eq.s32.totalorder %s13, 1
      %p30 = por %p28, %p29
      %p31 = scmp.ne.s32.totalorder %s23, %s26
      %p32 = scmp.eq.s32.totalorder %s13, 0
      %p33 = por %p31, %p32
      %p34 = scmp.ne.s32.totalorder %s23, %s26
      %p35 = scmp.eq.s32.totalorder %s18, 1
      %p36 = por %p34, %p35
      %p37 = scmp.ne.s32.totalorder %s26, %s27
      %p38 = scmp.eq.s32.totalorder %s18, 0
      %p39 = por %p37, %p38
      %p40 = scmp.ne.s32.totalorder %s26, %s27
      %p41 = scmp.eq.s32.totalorder %s19, 1
      %p42 = por %p40, %p41
      %p44 = scmp.ne.s32.totalorder %s27, %s43
      %p45 = scmp.eq.s32.totalorder %s19, 0
      %p46 = por %p44, %p45
      %s48 = sadd.s32 %s47, 1
      %p51 = scmp.eq.s32.totalorder %s13, 1
      %p52 = scmp.ne.s32.totalorder %s47, %s49
      %p53 = scmp.eq.s32.totalorder %s13, 0
      %p54 = por %p52, %p53
      %p55 = scmp.ne.s32.totalorder %s47, %s49
      %p56 = scmp.eq.s32.totalorder %s18, 1
      %p57 = por %p55, %p56
      %p58 = scmp.ne.s32.totalorder %s49, %s50
      %p59 = scmp.eq.s32.totalorder %s18, 0
      %p60 = por %p58, %p59
      %p61 = scmp.ne.s32.totalorder %s49, %s50
      %p62 = scmp.eq.s32.totalorder %s19, 1
      %p63 = por %p61, %p62
      %p65 = scmp.ne.s32.totalorder %s50, %s64
      %p66 = scmp.eq.s32.totalorder %s19, 0
      %p67 = por %p65, %p66
      %s69 = sadd.s32 %s68, 1
      %p72 = scmp.eq.s32.totalorder %s13, 1
      %p73 = scmp.ne.s32.totalorder %s68, %s70
      %p74 = scmp.eq.s32.totalorder %s13, 0
      %p75 = por %p73, %p74
      %p76 = scmp.ne.s32.totalorder %s68, %s70
      %p77 = scmp.eq.s32.totalorder %s18, 1
      %p78 = por %p76, %p77
      %p79 = scmp.ne.s32.totalorder %s70, %s71
      %p80 = scmp.eq.s32.totalorder %s18, 0
      %p81 = por %p79, %p80
      %p82 = scmp.ne.s32.totalorder %s70, %s71
      %p83 = scmp.eq.s32.totalorder %s19, 1
      %p84 = por %p82, %p83
      %p86 = scmp.ne.s32.totalorder %s71, %s85
      %p87 = scmp.eq.s32.totalorder %s19, 0
      %p88 = por %p86, %p87
      %s90 = sadd.s32 %s89, 1
      %p93 = scmp.eq.s32.totalorder %s13, 1
      %p94 = scmp.ne.s32.totalorder %s89, %s91
      %p95 = scmp.eq.s32.totalorder %s13, 0
      %p96 = por %p94, %p95
      %p97 = scmp.ne.s32.totalorder %s89, %s91
      %p98 = scmp.eq.s32.totalorder %s18, 1
      %p99 = por %p97, %p98
      %p100 = scmp.ne.s32.totalorder %s91, %s92
      %p101 = scmp.eq.s32.totalorder %s18, 0
      %p102 = por %p100, %p101
      %p103 = scmp.ne.s32.totalorder %s91, %s92
      %p104 = scmp.eq.s32.totalorder %s19, 1
      %p105 = por %p103, %p104
      %p107 = scmp.ne.s32.totalorder %s92, %s106
      %p108 = scmp.eq.s32.totalorder %s19, 0
      %p109 = por %p107, %p108
      %s110 = ssub.s32 %s13, %s20
      %p111 = scmp.eq.s32.totalorder %s110, 0
      %s113 = sadd.s32 %s112, 1
      %s114 = scalar_select %p111, %s112, %s113
      %p117 = pneg %p111
      %p118 = scmp.eq.s32.totalorder %s13, 1
      %p119 = por %p117, %p118
      %p120 = scmp.ne.s32.totalorder %s112, %s115
      %p121 = scmp.eq.s32.totalorder %s13, 0
      %p122 = por %p120, %p121
      %p123 = scmp.ne.s32.totalorder %s112, %s115
      %p124 = scmp.eq.s32.totalorder %s18, 1
      %p125 = por %p123, %p124
      %p126 = scmp.ne.s32.totalorder %s115, %s116
      %p127 = scmp.eq.s32.totalorder %s18, 0
      %p128 = por %p126, %p127
      %p129 = scmp.ne.s32.totalorder %s115, %s116
      %p130 = scmp.eq.s32.totalorder %s19, 1
      %p131 = por %p129, %p130
      %p133 = scmp.ne.s32.totalorder %s116, %s132
      %p134 = scmp.eq.s32.totalorder %s19, 0
      %p135 = por %p133, %p134
      %p136 = scmp.le.s32.totalorder 1, %s13
      %p137 = scmp.lt.s32.totalorder %s13, 3
      %p138 = pnand %p136, %p137
      %p139 = pneg %p138
      // Predicated region
      $region9: #{tpu_custom_call.1} parent=5 // pred_check
        _
      $region10: #{tpu_custom_call.1} parent=5 // pred_check_branch
        %141 = sbr.rel (%p138) target = $region12
      $region11: #{tpu_custom_call.1} parent=5 // pred_region
        %s142 = ssub.s32 %s13, 1
        // Predicated region
        $region13: #{tpu_custom_call.1} parent=11 // pred_check
          %p143 = pneg %p60
        $region14: #{tpu_custom_call.1} parent=11 // pred_check_branch
          %145 = sbr.rel (%p143) target = $region16
        $region15: #{tpu_custom_call.1} parent=11 // pred_region
          _
        $region16: #{tpu_custom_call.1} parent=11 // pred_fallthru
          _
        // Predicated region
        $region17: #{tpu_custom_call.1} parent=11 // pred_check
          %p146 = pneg %p81
        $region18: #{tpu_custom_call.1} parent=11 // pred_check_branch
          %148 = sbr.rel (%p146) target = $region20
        $region19: #{tpu_custom_call.1} parent=11 // pred_region
          _
        $region20: #{tpu_custom_call.1} parent=11 // pred_fallthru
          _
        // Predicated region
        $region21: #{tpu_custom_call.1} parent=11 // pred_check
          %p149 = pneg %p102
        $region22: #{tpu_custom_call.1} parent=11 // pred_check_branch
          %151 = sbr.rel (%p149) target = $region24
        $region23: #{tpu_custom_call.1} parent=11 // pred_region
          _
        $region24: #{tpu_custom_call.1} parent=11 // pred_fallthru
          _
      $region12: #{tpu_custom_call.1} parent=5 // pred_fallthru
        _
      %p152 = scmp.lt.s32.totalorder %s13, 2
      // Predicated region
      $region25: #{tpu_custom_call.1} parent=5 // pred_check
        %p153 = pneg %p152
      $region26: #{tpu_custom_call.1} parent=5 // pred_check_branch
        %155 = sbr.rel (%p153) target = $region28
      $region27: #{tpu_custom_call.1} parent=5 // pred_region
        // Predicated region
        $region29: #{tpu_custom_call.1} parent=27 // pred_check
          %p156 = pneg %p33
        $region30: #{tpu_custom_call.1} parent=27 // pred_check_branch
          %158 = sbr.rel (%p156) target = $region32
        $region31: #{tpu_custom_call.1} parent=27 // pred_region
          %p159 = scmp.lt.s32.totalorder %s13, 1
          %s160 = scalar_select %p159, %s13, 1
          %s161 = smul.addr %s160, 8
          %s162 = scalar_lea.vmem %s0, %s161
        $region32: #{tpu_custom_call.1} parent=27 // pred_fallthru
          _
      $region28: #{tpu_custom_call.1} parent=5 // pred_fallthru
        _
      %p163 = scmp.le.s32.totalorder 1, %s13
      %p164 = scmp.lt.s32.totalorder %s13, 3
      %p165 = pnand %p163, %p164
      %p166 = pneg %p165
      // Predicated region
      $region33: #{tpu_custom_call.1} parent=5 // pred_check
        _
      $region34: #{tpu_custom_call.1} parent=5 // pred_check_branch
        %168 = sbr.rel (%p165) target = $region36
      $region35: #{tpu_custom_call.1} parent=5 // pred_region
        %s169 = ssub.s32 %s13, 1
        %p170 = scmp.lt.s32.totalorder %s18, 1
        %s171 = scalar_select %p170, %s18, 1
        %s172 = smul.addr %s171, 8
        %s173 = scalar_lea.vmem %s0, %s172
        %p174 = pneg %p39
        %p175 = pneg %p36
        %p176 = pneg %p60
        %p177 = pneg %p57
        %p178 = pneg %p81
        %p179 = pneg %p78
        %p180 = pneg %p102
        %p181 = pneg %p99
        %p182 = pneg %p128
        %p183 = pneg %p125
        %s184 = sand.u32 %s115, 1
        %s185 = scalar_lea.sflag [#allocation3], %s184
        %s186 = sand.u32 %s115, 1
        %s187 = smul.addr %s186, 8
        %s188 = scalar_lea.vmem [#allocation2], %s187
        %p189 = scmp.lt.s32.totalorder %s18, 1
        %s190 = scalar_select %p189, %s18, 1
        %s191 = smul.addr %s190, 8
        %s192 = scalar_lea.vmem %s0, %s191
        %v193 = vld [vmem:[%s192] sm:$0xff]
        %v194 = vld [vmem:[%s1] sm:$0x1]
        %v195 = vld [vmem:[%s2] sm:$0xff]
        %v196 = vld [vmem:[%s2 + $0x8] sm:$0xff]
        %v197 = vld [vmem:[%s2 + $0x10] sm:$0xff]
        %v198 = vld [vmem:[%s2 + $0x18] sm:$0xff]
        %v199 = vld [vmem:[%s2 + $0x20] sm:$0xff]
        %v200 = vld [vmem:[%s2 + $0x28] sm:$0xff]
        %v201 = vld [vmem:[%s2 + $0x30] sm:$0xff]
        %v202 = vld [vmem:[%s2 + $0x38] sm:$0xff]
        %v203 = vld [vmem:[%s2 + $0x40] sm:$0xff]
        %v204 = vld [vmem:[%s2 + $0x48] sm:$0xff]
        %v205 = vld [vmem:[%s2 + $0x50] sm:$0xff]
        %v206 = vld [vmem:[%s2 + $0x58] sm:$0xff]
        %v207 = vld [vmem:[%s2 + $0x60] sm:$0xff]
        %v208 = vld [vmem:[%s2 + $0x68] sm:$0xff]
        %v209 = vld [vmem:[%s2 + $0x70] sm:$0xff]
        %v210 = vld [vmem:[%s2 + $0x78] sm:$0xff]
        %v211 = vld [vmem:[%s3] sm:$0xff]
        %v212 = vmul.f32 %v193, %v193
        %213 = vmatprep.subr.mxu0 0.0
        %v214 = vand.u32 %v210, 4294901760
        %215 = vmatpush1.msra.mxu0 %v214
        %216 = vmatprep.subr.mxu0 0.0
        %v217 = vand.u32 %v209, 4294901760
        %218 = vmatpush1.msra.mxu0 %v217
        %219 = vmatprep.subr.mxu0 0.0
        %v220 = vand.u32 %v208, 4294901760
        %221 = vmatpush1.msra.mxu0 %v220
        %222 = vmatprep.subr.mxu0 0.0
        %v223 = vand.u32 %v207, 4294901760
        %224 = vmatpush1.msra.mxu0 %v223
        %225 = vmatprep.subr.mxu0 0.0
        %v226 = vand.u32 %v206, 4294901760
        %227 = vmatpush1.msra.mxu0 %v226
        %228 = vmatprep.subr.mxu0 0.0
        %v229 = vand.u32 %v205, 4294901760
        %230 = vmatpush1.msra.mxu0 %v229
        %231 = vmatprep.subr.mxu0 0.0
        %v232 = vand.u32 %v204, 4294901760
        %233 = vmatpush1.msra.mxu0 %v232
        %234 = vmatprep.subr.mxu0 0.0
        %v235 = vand.u32 %v203, 4294901760
        %236 = vmatpush1.msra.mxu0 %v235
        %237 = vmatprep.subr.mxu0 0.0
        %v238 = vand.u32 %v202, 4294901760
        %239 = vmatpush1.msra.mxu0 %v238
        %240 = vmatprep.subr.mxu0 0.0
        %v241 = vand.u32 %v201, 4294901760
        %242 = vmatpush1.msra.mxu0 %v241
        %243 = vmatprep.subr.mxu0 0.0
        %v244 = vand.u32 %v200, 4294901760
        %245 = vmatpush1.msra.mxu0 %v244
        %246 = vmatprep.subr.mxu0 0.0
        %v247 = vand.u32 %v199, 4294901760
        %248 = vmatpush1.msra.mxu0 %v247
        %249 = vmatprep.subr.mxu0 0.0
        %v250 = vand.u32 %v198, 4294901760
        %251 = vmatpush1.msra.mxu0 %v250
        %252 = vmatprep.subr.mxu0 0.0
        %v253 = vand.u32 %v197, 4294901760
        %254 = vmatpush1.msra.mxu0 %v253
        %255 = vmatprep.subr.mxu0 0.0
        %v256 = vand.u32 %v196, 4294901760
        %257 = vmatpush1.msra.mxu0 %v256
        %258 = vmatprep.subr.mxu0 0.0
        %v259 = vand.u32 %v195, 4294901760
        %260 = vmatpush1.msra.mxu0 %v259
        %261 = vmatprep.subr.mxu0 0.0
        %262 = vmatpush2.msra.mxu0 0.0
        %263 = vmatprep.subr.mxu0 0.0
        %264 = vmatpush2.msra.mxu0 0.0
        %265 = vmatprep.subr.mxu0 0.0
        %266 = vmatpush2.msra.mxu0 0.0
        %267 = vmatprep.subr.mxu0 0.0
        %268 = vmatpush2.msra.mxu0 0.0
        %269 = vmatprep.subr.mxu0 0.0
        %270 = vmatpush2.msra.mxu0 0.0
        %271 = vmatprep.subr.mxu0 0.0
        %272 = vmatpush2.msra.mxu0 0.0
        %273 = vmatprep.subr.mxu0 0.0
        %274 = vmatpush2.msra.mxu0 0.0
        %275 = vmatprep.subr.mxu0 0.0
        %276 = vmatpush2.msra.mxu0 0.0
        %277 = vmatprep.subr.mxu0 0.0
        %278 = vmatpush2.msra.mxu0 0.0
        %279 = vmatprep.subr.mxu0 0.0
        %280 = vmatpush2.msra.mxu0 0.0
        %281 = vmatprep.subr.mxu0 0.0
        %282 = vmatpush2.msra.mxu0 0.0
        %283 = vmatprep.subr.mxu0 0.0
        %284 = vmatpush2.msra.mxu0 0.0
        %285 = vmatprep.subr.mxu0 0.0
        %286 = vmatpush2.msra.mxu0 0.0
        %287 = vmatprep.subr.mxu0 0.0
        %288 = vmatpush2.msra.mxu0 0.0
        %289 = vmatprep.subr.mxu0 0.0
        %290 = vmatpush2.msra.mxu0 0.0
        %291 = vmatprep.subr.mxu0 0.0
        %292 = vmatpush2.msra.mxu0 0.0
        %293 = vmatprep.mubr.f32.mxu0 0.0
        %v294 = vand.u32 %v193, 4294901760
        %v295 = vsub.f32 %v193, %v294
        %v296 = vand.u32 %v295, 4294901760
        %v297 = vsub.f32 %v295, %v296
        %v298 = vand.u32 %v297, 4294901760
        %299 = vmatmul.mubr.f32.gmra.mxu0 %v298
        %v300 = vpop.f32.mrf.mxu0
        %v301 = vadd.f32 0.0, %v300
        %v302 = vpop.f32.mrf.mxu0
        %303 = vmatprep.mubr.f32.mxu0 0.0
        %v304 = vand.u32 %v212, 4294901760
        %v305 = vsub.f32 %v212, %v304
        %v306 = vand.u32 %v305, 4294901760
        %v307 = vsub.f32 %v305, %v306
        %v308 = vand.u32 %v307, 4294901760
        %309 = vmatmul.mubr.f32.gmra.mxu0 %v308
        %v310 = vpop.f32.mrf.mxu0
        %v311 = vadd.f32 0.0, %v310
        %v312 = vpop.f32.mrf.mxu0
        %313 = vdwg.mxu0
        %314 = vmatprep.subr.mxu0 0.0
        %v315 = vand.u32 %v210, 4294901760
        %v316 = vsub.f32 %v210, %v315
        %v317 = vand.u32 %v316, 4294901760
        %v318 = vsub.f32 %v316, %v317
        %v319 = vand.u32 %v318, 4294901760
        %320 = vmatpush1.msra.mxu0 %v319
        %321 = vmatprep.subr.mxu0 0.0
        %v322 = vand.u32 %v209, 4294901760
        %v323 = vsub.f32 %v209, %v322
        %v324 = vand.u32 %v323, 4294901760
        %v325 = vsub.f32 %v323, %v324
        %v326 = vand.u32 %v325, 4294901760
        %327 = vmatpush1.msra.mxu0 %v326
        %328 = vmatprep.subr.mxu0 0.0
        %v329 = vand.u32 %v208, 4294901760
        %v330 = vsub.f32 %v208, %v329
        %v331 = vand.u32 %v330, 4294901760
        %v332 = vsub.f32 %v330, %v331
        %v333 = vand.u32 %v332, 4294901760
        %334 = vmatpush1.msra.mxu0 %v333
        %335 = vmatprep.subr.mxu0 0.0
        %v336 = vand.u32 %v207, 4294901760
        %v337 = vsub.f32 %v207, %v336
        %v338 = vand.u32 %v337, 4294901760
        %v339 = vsub.f32 %v337, %v338
        %v340 = vand.u32 %v339, 4294901760
        %341 = vmatpush1.msra.mxu0 %v340
        %342 = vmatprep.subr.mxu0 0.0
        %v343 = vand.u32 %v206, 4294901760
        %v344 = vsub.f32 %v206, %v343
        %v345 = vand.u32 %v344, 4294901760
        %v346 = vsub.f32 %v344, %v345
        %v347 = vand.u32 %v346, 4294901760
        %348 = vmatpush1.msra.mxu0 %v347
        %349 = vmatprep.subr.mxu0 0.0
        %v350 = vand.u32 %v205, 4294901760
        %v351 = vsub.f32 %v205, %v350
        %v352 = vand.u32 %v351, 4294901760
        %v353 = vsub.f32 %v351, %v352
        %v354 = vand.u32 %v353, 4294901760
        %355 = vmatpush1.msra.mxu0 %v354
        %356 = vmatprep.subr.mxu0 0.0
        %v357 = vand.u32 %v204, 4294901760
        %v358 = vsub.f32 %v204, %v357
        %v359 = vand.u32 %v358, 4294901760
        %v360 = vsub.f32 %v358, %v359
        %v361 = vand.u32 %v360, 4294901760
        %362 = vmatpush1.msra.mxu0 %v361
        %363 = vmatprep.subr.mxu0 0.0
        %v364 = vand.u32 %v203, 4294901760
        %v365 = vsub.f32 %v203, %v364
        %v366 = vand.u32 %v365, 4294901760
        %v367 = vsub.f32 %v365, %v366
        %v368 = vand.u32 %v367, 4294901760
        %369 = vmatpush1.msra.mxu0 %v368
        %370 = vmatprep.subr.mxu0 0.0
        %v371 = vand.u32 %v202, 4294901760
        %v372 = vsub.f32 %v202, %v371
        %v373 = vand.u32 %v372, 4294901760
        %v374 = vsub.f32 %v372, %v373
        %v375 = vand.u32 %v374, 4294901760
        %376 = vmatpush1.msra.mxu0 %v375
        %377 = vmatprep.subr.mxu0 0.0
        %v378 = vand.u32 %v201, 4294901760
        %v379 = vsub.f32 %v201, %v378
        %v380 = vand.u32 %v379, 4294901760
        %v381 = vsub.f32 %v379, %v380
        %v382 = vand.u32 %v381, 4294901760
        %383 = vmatpush1.msra.mxu0 %v382
        %384 = vmatprep.subr.mxu0 0.0
        %v385 = vand.u32 %v200, 4294901760
        %v386 = vsub.f32 %v200, %v385
        %v387 = vand.u32 %v386, 4294901760
        %v388 = vsub.f32 %v386, %v387
        %v389 = vand.u32 %v388, 4294901760
        %390 = vmatpush1.msra.mxu0 %v389
        %391 = vmatprep.subr.mxu0 0.0
        %v392 = vand.u32 %v199, 4294901760
        %v393 = vsub.f32 %v199, %v392
        %v394 = vand.u32 %v393, 4294901760
        %v395 = vsub.f32 %v393, %v394
        %v396 = vand.u32 %v395, 4294901760
        %397 = vmatpush1.msra.mxu0 %v396
        %398 = vmatprep.subr.mxu0 0.0
        %v399 = vand.u32 %v198, 4294901760
        %v400 = vsub.f32 %v198, %v399
        %v401 = vand.u32 %v400, 4294901760
        %v402 = vsub.f32 %v400, %v401
        %v403 = vand.u32 %v402, 4294901760
        %404 = vmatpush1.msra.mxu0 %v403
        %405 = vmatprep.subr.mxu0 0.0
        %v406 = vand.u32 %v197, 4294901760
        %v407 = vsub.f32 %v197, %v406
        %v408 = vand.u32 %v407, 4294901760
        %v409 = vsub.f32 %v407, %v408
        %v410 = vand.u32 %v409, 4294901760
        %411 = vmatpush1.msra.mxu0 %v410
        %412 = vmatprep.subr.mxu0 0.0
        %v413 = vand.u32 %v196, 4294901760
        %v414 = vsub.f32 %v196, %v413
        %v415 = vand.u32 %v414, 4294901760
        %v416 = vsub.f32 %v414, %v415
        %v417 = vand.u32 %v416, 4294901760
        %418 = vmatpush1.msra.mxu0 %v417
        %419 = vmatprep.subr.mxu0 0.0
        %v420 = vand.u32 %v195, 4294901760
        %v421 = vsub.f32 %v195, %v420
        %v422 = vand.u32 %v421, 4294901760
        %v423 = vsub.f32 %v421, %v422
        %v424 = vand.u32 %v423, 4294901760
        %425 = vmatpush1.msra.mxu0 %v424
        %426 = vmatprep.subr.mxu0 0.0
        %427 = vmatpush2.msra.mxu0 0.0
        %428 = vmatprep.subr.mxu0 0.0
        %429 = vmatpush2.msra.mxu0 0.0
        %430 = vmatprep.subr.mxu0 0.0
        %431 = vmatpush2.msra.mxu0 0.0
        %432 = vmatprep.subr.mxu0 0.0
        %433 = vmatpush2.msra.mxu0 0.0
        %434 = vmatprep.subr.mxu0 0.0
        %435 = vmatpush2.msra.mxu0 0.0
        %436 = vmatprep.subr.mxu0 0.0
        %437 = vmatpush2.msra.mxu0 0.0
        %438 = vmatprep.subr.mxu0 0.0
        %439 = vmatpush2.msra.mxu0 0.0
        %440 = vmatprep.subr.mxu0 0.0
        %441 = vmatpush2.msra.mxu0 0.0
        %442 = vmatprep.subr.mxu0 0.0
        %443 = vmatpush2.msra.mxu0 0.0
        %444 = vmatprep.subr.mxu0 0.0
        %445 = vmatpush2.msra.mxu0 0.0
        %446 = vmatprep.subr.mxu0 0.0
        %447 = vmatpush2.msra.mxu0 0.0
        %448 = vmatprep.subr.mxu0 0.0
        %449 = vmatpush2.msra.mxu0 0.0
        %450 = vmatprep.subr.mxu0 0.0
        %451 = vmatpush2.msra.mxu0 0.0
        %452 = vmatprep.subr.mxu0 0.0
        %453 = vmatpush2.msra.mxu0 0.0
        %454 = vmatprep.subr.mxu0 0.0
        %455 = vmatpush2.msra.mxu0 0.0
        %456 = vmatprep.subr.mxu0 0.0
        %457 = vmatpush2.msra.mxu0 0.0
        %458 = vmatprep.mubr.f32.mxu0 0.0
        %v459 = vand.u32 %v193, 4294901760
        %460 = vmatmul.mubr.f32.gmra.mxu0 %v459
        %v461 = vpop.f32.mrf.mxu0
        %v462 = vadd.f32 %v301, %v461
        %v463 = vpop.f32.mrf.mxu0
        %464 = vmatprep.mubr.f32.mxu0 0.0
        %v465 = vand.u32 %v212, 4294901760
        %466 = vmatmul.mubr.f32.gmra.mxu0 %v465
        %v467 = vpop.f32.mrf.mxu0
        %v468 = vadd.f32 %v311, %v467
        %v469 = vpop.f32.mrf.mxu0
        %470 = vdwg.mxu0
        %471 = vmatprep.subr.mxu0 0.0
        %v472 = vand.u32 %v210, 4294901760
        %v473 = vsub.f32 %v210, %v472
        %474 = vmatpush1.msra.mxu0 %v473
        %475 = vmatprep.subr.mxu0 0.0
        %v476 = vand.u32 %v209, 4294901760
        %v477 = vsub.f32 %v209, %v476
        %478 = vmatpush1.msra.mxu0 %v477
        %479 = vmatprep.subr.mxu0 0.0
        %v480 = vand.u32 %v208, 4294901760
        %v481 = vsub.f32 %v208, %v480
        %482 = vmatpush1.msra.mxu0 %v481
        %483 = vmatprep.subr.mxu0 0.0
        %v484 = vand.u32 %v207, 4294901760
        %v485 = vsub.f32 %v207, %v484
        %486 = vmatpush1.msra.mxu0 %v485
        %487 = vmatprep.subr.mxu0 0.0
        %v488 = vand.u32 %v206, 4294901760
        %v489 = vsub.f32 %v206, %v488
        %490 = vmatpush1.msra.mxu0 %v489
        %491 = vmatprep.subr.mxu0 0.0
        %v492 = vand.u32 %v205, 4294901760
        %v493 = vsub.f32 %v205, %v492
        %494 = vmatpush1.msra.mxu0 %v493
        %495 = vmatprep.subr.mxu0 0.0
        %v496 = vand.u32 %v204, 4294901760
        %v497 = vsub.f32 %v204, %v496
        %498 = vmatpush1.msra.mxu0 %v497
        %499 = vmatprep.subr.mxu0 0.0
        %v500 = vand.u32 %v203, 4294901760
        %v501 = vsub.f32 %v203, %v500
        %502 = vmatpush1.msra.mxu0 %v501
        %503 = vmatprep.subr.mxu0 0.0
        %v504 = vand.u32 %v202, 4294901760
        %v505 = vsub.f32 %v202, %v504
        %506 = vmatpush1.msra.mxu0 %v505
        %507 = vmatprep.subr.mxu0 0.0
        %v508 = vand.u32 %v201, 4294901760
        %v509 = vsub.f32 %v201, %v508
        %510 = vmatpush1.msra.mxu0 %v509
        %511 = vmatprep.subr.mxu0 0.0
        %v512 = vand.u32 %v200, 4294901760
        %v513 = vsub.f32 %v200, %v512
        %514 = vmatpush1.msra.mxu0 %v513
        %515 = vmatprep.subr.mxu0 0.0
        %v516 = vand.u32 %v199, 4294901760
        %v517 = vsub.f32 %v199, %v516
        %518 = vmatpush1.msra.mxu0 %v517
        %519 = vmatprep.subr.mxu0 0.0
        %v520 = vand.u32 %v198, 4294901760
        %v521 = vsub.f32 %v198, %v520
        %522 = vmatpush1.msra.mxu0 %v521
        %523 = vmatprep.subr.mxu0 0.0
        %v524 = vand.u32 %v197, 4294901760
        %v525 = vsub.f32 %v197, %v524
        %526 = vmatpush1.msra.mxu0 %v525
        %527 = vmatprep.subr.mxu0 0.0
        %v528 = vand.u32 %v196, 4294901760
        %v529 = vsub.f32 %v196, %v528
        %530 = vmatpush1.msra.mxu0 %v529
        %531 = vmatprep.subr.mxu0 0.0
        %v532 = vand.u32 %v195, 4294901760
        %v533 = vsub.f32 %v195, %v532
        %534 = vmatpush1.msra.mxu0 %v533
        %535 = vmatprep.subr.mxu0 0.0
        %536 = vmatpush2.msra.mxu0 0.0
        %537 = vmatprep.subr.mxu0 0.0
        %538 = vmatpush2.msra.mxu0 0.0
        %539 = vmatprep.subr.mxu0 0.0
        %540 = vmatpush2.msra.mxu0 0.0
        %541 = vmatprep.subr.mxu0 0.0
        %542 = vmatpush2.msra.mxu0 0.0
        %543 = vmatprep.subr.mxu0 0.0
        %544 = vmatpush2.msra.mxu0 0.0
        %545 = vmatprep.subr.mxu0 0.0
        %546 = vmatpush2.msra.mxu0 0.0
        %547 = vmatprep.subr.mxu0 0.0
        %548 = vmatpush2.msra.mxu0 0.0
        %549 = vmatprep.subr.mxu0 0.0
        %550 = vmatpush2.msra.mxu0 0.0
        %551 = vmatprep.subr.mxu0 0.0
        %552 = vmatpush2.msra.mxu0 0.0
        %553 = vmatprep.subr.mxu0 0.0
        %554 = vmatpush2.msra.mxu0 0.0
        %555 = vmatprep.subr.mxu0 0.0
        %556 = vmatpush2.msra.mxu0 0.0
        %557 = vmatprep.subr.mxu0 0.0
        %558 = vmatpush2.msra.mxu0 0.0
        %559 = vmatprep.subr.mxu0 0.0
        %560 = vmatpush2.msra.mxu0 0.0
        %561 = vmatprep.subr.mxu0 0.0
        %562 = vmatpush2.msra.mxu0 0.0
        %563 = vmatprep.subr.mxu0 0.0
        %564 = vmatpush2.msra.mxu0 0.0
        %565 = vmatprep.subr.mxu0 0.0
        %566 = vmatpush2.msra.mxu0 0.0
        %567 = vmatprep.mubr.f32.mxu0 0.0
        %v568 = vand.u32 %v193, 4294901760
        %v569 = vsub.f32 %v193, %v568
        %570 = vmatmul.mubr.f32.gmra.mxu0 %v569
        %v571 = vpop.f32.mrf.mxu0
        %v572 = vadd.f32 %v462, %v571
        %v573 = vpop.f32.mrf.mxu0
        %574 = vmatprep.mubr.f32.mxu0 0.0
        %v575 = vand.u32 %v212, 4294901760
        %v576 = vsub.f32 %v212, %v575
        %577 = vmatmul.mubr.f32.gmra.mxu0 %v576
        %v578 = vpop.f32.mrf.mxu0
        %v579 = vadd.f32 %v468, %v578
        %v580 = vpop.f32.mrf.mxu0
        %581 = vdwg.mxu0
        %582 = vmatprep.subr.mxu0 0.0
        %v583 = vand.u32 %v210, 4294901760
        %584 = vmatpush1.msra.mxu0 %v583
        %585 = vmatprep.subr.mxu0 0.0
        %v586 = vand.u32 %v209, 4294901760
        %587 = vmatpush1.msra.mxu0 %v586
        %588 = vmatprep.subr.mxu0 0.0
        %v589 = vand.u32 %v208, 4294901760
        %590 = vmatpush1.msra.mxu0 %v589
        %591 = vmatprep.subr.mxu0 0.0
        %v592 = vand.u32 %v207, 4294901760
        %593 = vmatpush1.msra.mxu0 %v592
        %594 = vmatprep.subr.mxu0 0.0
        %v595 = vand.u32 %v206, 4294901760
        %596 = vmatpush1.msra.mxu0 %v595
        %597 = vmatprep.subr.mxu0 0.0
        %v598 = vand.u32 %v205, 4294901760
        %599 = vmatpush1.msra.mxu0 %v598
        %600 = vmatprep.subr.mxu0 0.0
        %v601 = vand.u32 %v204, 4294901760
        %602 = vmatpush1.msra.mxu0 %v601
        %603 = vmatprep.subr.mxu0 0.0
        %v604 = vand.u32 %v203, 4294901760
        %605 = vmatpush1.msra.mxu0 %v604
        %606 = vmatprep.subr.mxu0 0.0
        %v607 = vand.u32 %v202, 4294901760
        %608 = vmatpush1.msra.mxu0 %v607
        %609 = vmatprep.subr.mxu0 0.0
        %v610 = vand.u32 %v201, 4294901760
        %611 = vmatpush1.msra.mxu0 %v610
        %612 = vmatprep.subr.mxu0 0.0
        %v613 = vand.u32 %v200, 4294901760
        %614 = vmatpush1.msra.mxu0 %v613
        %615 = vmatprep.subr.mxu0 0.0
        %v616 = vand.u32 %v199, 4294901760
        %617 = vmatpush1.msra.mxu0 %v616
        %618 = vmatprep.subr.mxu0 0.0
        %v619 = vand.u32 %v198, 4294901760
        %620 = vmatpush1.msra.mxu0 %v619
        %621 = vmatprep.subr.mxu0 0.0
        %v622 = vand.u32 %v197, 4294901760
        %623 = vmatpush1.msra.mxu0 %v622
        %624 = vmatprep.subr.mxu0 0.0
        %v625 = vand.u32 %v196, 4294901760
        %626 = vmatpush1.msra.mxu0 %v625
        %627 = vmatprep.subr.mxu0 0.0
        %v628 = vand.u32 %v195, 4294901760
        %629 = vmatpush1.msra.mxu0 %v628
        %630 = vmatprep.subr.mxu0 0.0
        %631 = vmatpush2.msra.mxu0 0.0
        %632 = vmatprep.subr.mxu0 0.0
        %633 = vmatpush2.msra.mxu0 0.0
        %634 = vmatprep.subr.mxu0 0.0
        %635 = vmatpush2.msra.mxu0 0.0
        %636 = vmatprep.subr.mxu0 0.0
        %637 = vmatpush2.msra.mxu0 0.0
        %638 = vmatprep.subr.mxu0 0.0
        %639 = vmatpush2.msra.mxu0 0.0
        %640 = vmatprep.subr.mxu0 0.0
        %641 = vmatpush2.msra.mxu0 0.0
        %642 = vmatprep.subr.mxu0 0.0
        %643 = vmatpush2.msra.mxu0 0.0
        %644 = vmatprep.subr.mxu0 0.0
        %645 = vmatpush2.msra.mxu0 0.0
        %646 = vmatprep.subr.mxu0 0.0
        %647 = vmatpush2.msra.mxu0 0.0
        %648 = vmatprep.subr.mxu0 0.0
        %649 = vmatpush2.msra.mxu0 0.0
        %650 = vmatprep.subr.mxu0 0.0
        %651 = vmatpush2.msra.mxu0 0.0
        %652 = vmatprep.subr.mxu0 0.0
        %653 = vmatpush2.msra.mxu0 0.0
        %654 = vmatprep.subr.mxu0 0.0
        %655 = vmatpush2.msra.mxu0 0.0
        %656 = vmatprep.subr.mxu0 0.0
        %657 = vmatpush2.msra.mxu0 0.0
        %658 = vmatprep.subr.mxu0 0.0
        %659 = vmatpush2.msra.mxu0 0.0
        %660 = vmatprep.subr.mxu0 0.0
        %661 = vmatpush2.msra.mxu0 0.0
        %662 = vmatprep.mubr.f32.mxu0 0.0
        %v663 = vand.u32 %v193, 4294901760
        %v664 = vsub.f32 %v193, %v663
        %v665 = vand.u32 %v664, 4294901760
        %666 = vmatmul.mubr.f32.gmra.mxu0 %v665
        %v667 = vpop.f32.mrf.mxu0
        %v668 = vadd.f32 %v572, %v667
        %v669 = vpop.f32.mrf.mxu0
        %670 = vmatprep.mubr.f32.mxu0 0.0
        %v671 = vand.u32 %v212, 4294901760
        %v672 = vsub.f32 %v212, %v671
        %v673 = vand.u32 %v672, 4294901760
        %674 = vmatmul.mubr.f32.gmra.mxu0 %v673
        %v675 = vpop.f32.mrf.mxu0
        %v676 = vadd.f32 %v579, %v675
        %v677 = vpop.f32.mrf.mxu0
        %678 = vdwg.mxu0
        %679 = vmatprep.subr.mxu0 0.0
        %v680 = vand.u32 %v210, 4294901760
        %v681 = vsub.f32 %v210, %v680
        %v682 = vand.u32 %v681, 4294901760
        %683 = vmatpush1.msra.mxu0 %v682
        %684 = vmatprep.subr.mxu0 0.0
        %v685 = vand.u32 %v209, 4294901760
        %v686 = vsub.f32 %v209, %v685
        %v687 = vand.u32 %v686, 4294901760
        %688 = vmatpush1.msra.mxu0 %v687
        %689 = vmatprep.subr.mxu0 0.0
        %v690 = vand.u32 %v208, 4294901760
        %v691 = vsub.f32 %v208, %v690
        %v692 = vand.u32 %v691, 4294901760
        %693 = vmatpush1.msra.mxu0 %v692
        %694 = vmatprep.subr.mxu0 0.0
        %v695 = vand.u32 %v207, 4294901760
        %v696 = vsub.f32 %v207, %v695
        %v697 = vand.u32 %v696, 4294901760
        %698 = vmatpush1.msra.mxu0 %v697
        %699 = vmatprep.subr.mxu0 0.0
        %v700 = vand.u32 %v206, 4294901760
        %v701 = vsub.f32 %v206, %v700
        %v702 = vand.u32 %v701, 4294901760
        %703 = vmatpush1.msra.mxu0 %v702
        %704 = vmatprep.subr.mxu0 0.0
        %v705 = vand.u32 %v205, 4294901760
        %v706 = vsub.f32 %v205, %v705
        %v707 = vand.u32 %v706, 4294901760
        %708 = vmatpush1.msra.mxu0 %v707
        %709 = vmatprep.subr.mxu0 0.0
        %v710 = vand.u32 %v204, 4294901760
        %v711 = vsub.f32 %v204, %v710
        %v712 = vand.u32 %v711, 4294901760
        %713 = vmatpush1.msra.mxu0 %v712
        %714 = vmatprep.subr.mxu0 0.0
        %v715 = vand.u32 %v203, 4294901760
        %v716 = vsub.f32 %v203, %v715
        %v717 = vand.u32 %v716, 4294901760
        %718 = vmatpush1.msra.mxu0 %v717
        %719 = vmatprep.subr.mxu0 0.0
        %v720 = vand.u32 %v202, 4294901760
        %v721 = vsub.f32 %v202, %v720
        %v722 = vand.u32 %v721, 4294901760
        %723 = vmatpush1.msra.mxu0 %v722
        %724 = vmatprep.subr.mxu0 0.0
        %v725 = vand.u32 %v201, 4294901760
        %v726 = vsub.f32 %v201, %v725
        %v727 = vand.u32 %v726, 4294901760
        %728 = vmatpush1.msra.mxu0 %v727
        %729 = vmatprep.subr.mxu0 0.0
        %v730 = vand.u32 %v200, 4294901760
        %v731 = vsub.f32 %v200, %v730
        %v732 = vand.u32 %v731, 4294901760
        %733 = vmatpush1.msra.mxu0 %v732
        %734 = vmatprep.subr.mxu0 0.0
        %v735 = vand.u32 %v199, 4294901760
        %v736 = vsub.f32 %v199, %v735
        %v737 = vand.u32 %v736, 4294901760
        %738 = vmatpush1.msra.mxu0 %v737
        %739 = vmatprep.subr.mxu0 0.0
        %v740 = vand.u32 %v198, 4294901760
        %v741 = vsub.f32 %v198, %v740
        %v742 = vand.u32 %v741, 4294901760
        %743 = vmatpush1.msra.mxu0 %v742
        %744 = vmatprep.subr.mxu0 0.0
        %v745 = vand.u32 %v197, 4294901760
        %v746 = vsub.f32 %v197, %v745
        %v747 = vand.u32 %v746, 4294901760
        %748 = vmatpush1.msra.mxu0 %v747
        %749 = vmatprep.subr.mxu0 0.0
        %v750 = vand.u32 %v196, 4294901760
        %v751 = vsub.f32 %v196, %v750
        %v752 = vand.u32 %v751, 4294901760
        %753 = vmatpush1.msra.mxu0 %v752
        %754 = vmatprep.subr.mxu0 0.0
        %v755 = vand.u32 %v195, 4294901760
        %v756 = vsub.f32 %v195, %v755
        %v757 = vand.u32 %v756, 4294901760
        %758 = vmatpush1.msra.mxu0 %v757
        %759 = vmatprep.subr.mxu0 0.0
        %760 = vmatpush2.msra.mxu0 0.0
        %761 = vmatprep.subr.mxu0 0.0
        %762 = vmatpush2.msra.mxu0 0.0
        %763 = vmatprep.subr.mxu0 0.0
        %764 = vmatpush2.msra.mxu0 0.0
        %765 = vmatprep.subr.mxu0 0.0
        %766 = vmatpush2.msra.mxu0 0.0
        %767 = vmatprep.subr.mxu0 0.0
        %768 = vmatpush2.msra.mxu0 0.0
        %769 = vmatprep.subr.mxu0 0.0
        %770 = vmatpush2.msra.mxu0 0.0
        %771 = vmatprep.subr.mxu0 0.0
        %772 = vmatpush2.msra.mxu0 0.0
        %773 = vmatprep.subr.mxu0 0.0
        %774 = vmatpush2.msra.mxu0 0.0
        %775 = vmatprep.subr.mxu0 0.0
        %776 = vmatpush2.msra.mxu0 0.0
        %777 = vmatprep.subr.mxu0 0.0
        %778 = vmatpush2.msra.mxu0 0.0
        %779 = vmatprep.subr.mxu0 0.0
        %780 = vmatpush2.msra.mxu0 0.0
        %781 = vmatprep.subr.mxu0 0.0
        %782 = vmatpush2.msra.mxu0 0.0
        %783 = vmatprep.subr.mxu0 0.0
        %784 = vmatpush2.msra.mxu0 0.0
        %785 = vmatprep.subr.mxu0 0.0
        %786 = vmatpush2.msra.mxu0 0.0
        %787 = vmatprep.subr.mxu0 0.0
        %788 = vmatpush2.msra.mxu0 0.0
        %789 = vmatprep.subr.mxu0 0.0
        %790 = vmatpush2.msra.mxu0 0.0
        %791 = vmatprep.mubr.f32.mxu0 0.0
        %v792 = vand.u32 %v193, 4294901760
        %793 = vmatmul.mubr.f32.gmra.mxu0 %v792
        %v794 = vpop.f32.mrf.mxu0
        %v795 = vadd.f32 %v668, %v794
        %v796 = vpop.f32.mrf.mxu0
        %797 = vmatprep.mubr.f32.mxu0 0.0
        %v798 = vand.u32 %v212, 4294901760
        %799 = vmatmul.mubr.f32.gmra.mxu0 %v798
        %v800 = vpop.f32.mrf.mxu0
        %v801 = vadd.f32 %v676, %v800
        %v802 = vpop.f32.mrf.mxu0
        %803 = vdwg.mxu0
        %804 = vmatprep.subr.mxu0 0.0
        %v805 = vand.u32 %v210, 4294901760
        %806 = vmatpush1.msra.mxu0 %v805
        %807 = vmatprep.subr.mxu0 0.0
        %v808 = vand.u32 %v209, 4294901760
        %809 = vmatpush1.msra.mxu0 %v808
        %810 = vmatprep.subr.mxu0 0.0
        %v811 = vand.u32 %v208, 4294901760
        %812 = vmatpush1.msra.mxu0 %v811
        %813 = vmatprep.subr.mxu0 0.0
        %v814 = vand.u32 %v207, 4294901760
        %815 = vmatpush1.msra.mxu0 %v814
        %816 = vmatprep.subr.mxu0 0.0
        %v817 = vand.u32 %v206, 4294901760
        %818 = vmatpush1.msra.mxu0 %v817
        %819 = vmatprep.subr.mxu0 0.0
        %v820 = vand.u32 %v205, 4294901760
        %821 = vmatpush1.msra.mxu0 %v820
        %822 = vmatprep.subr.mxu0 0.0
        %v823 = vand.u32 %v204, 4294901760
        %824 = vmatpush1.msra.mxu0 %v823
        %825 = vmatprep.subr.mxu0 0.0
        %v826 = vand.u32 %v203, 4294901760
        %827 = vmatpush1.msra.mxu0 %v826
        %828 = vmatprep.subr.mxu0 0.0
        %v829 = vand.u32 %v202, 4294901760
        %830 = vmatpush1.msra.mxu0 %v829
        %831 = vmatprep.subr.mxu0 0.0
        %v832 = vand.u32 %v201, 4294901760
        %833 = vmatpush1.msra.mxu0 %v832
        %834 = vmatprep.subr.mxu0 0.0
        %v835 = vand.u32 %v200, 4294901760
        %836 = vmatpush1.msra.mxu0 %v835
        %837 = vmatprep.subr.mxu0 0.0
        %v838 = vand.u32 %v199, 4294901760
        %839 = vmatpush1.msra.mxu0 %v838
        %840 = vmatprep.subr.mxu0 0.0
        %v841 = vand.u32 %v198, 4294901760
        %842 = vmatpush1.msra.mxu0 %v841
        %843 = vmatprep.subr.mxu0 0.0
        %v844 = vand.u32 %v197, 4294901760
        %845 = vmatpush1.msra.mxu0 %v844
        %846 = vmatprep.subr.mxu0 0.0
        %v847 = vand.u32 %v196, 4294901760
        %848 = vmatpush1.msra.mxu0 %v847
        %849 = vmatprep.subr.mxu0 0.0
        %v850 = vand.u32 %v195, 4294901760
        %851 = vmatpush1.msra.mxu0 %v850
        %852 = vmatprep.subr.mxu0 0.0
        %853 = vmatpush2.msra.mxu0 0.0
        %854 = vmatprep.subr.mxu0 0.0
        %855 = vmatpush2.msra.mxu0 0.0
        %856 = vmatprep.subr.mxu0 0.0
        %857 = vmatpush2.msra.mxu0 0.0
        %858 = vmatprep.subr.mxu0 0.0
        %859 = vmatpush2.msra.mxu0 0.0
        %860 = vmatprep.subr.mxu0 0.0
        %861 = vmatpush2.msra.mxu0 0.0
        %862 = vmatprep.subr.mxu0 0.0
        %863 = vmatpush2.msra.mxu0 0.0
        %864 = vmatprep.subr.mxu0 0.0
        %865 = vmatpush2.msra.mxu0 0.0
        %866 = vmatprep.subr.mxu0 0.0
        %867 = vmatpush2.msra.mxu0 0.0
        %868 = vmatprep.subr.mxu0 0.0
        %869 = vmatpush2.msra.mxu0 0.0
        %870 = vmatprep.subr.mxu0 0.0
        %871 = vmatpush2.msra.mxu0 0.0
        %872 = vmatprep.subr.mxu0 0.0
        %873 = vmatpush2.msra.mxu0 0.0
        %874 = vmatprep.subr.mxu0 0.0
        %875 = vmatpush2.msra.mxu0 0.0
        %876 = vmatprep.subr.mxu0 0.0
        %877 = vmatpush2.msra.mxu0 0.0
        %878 = vmatprep.subr.mxu0 0.0
        %879 = vmatpush2.msra.mxu0 0.0
        %880 = vmatprep.subr.mxu0 0.0
        %881 = vmatpush2.msra.mxu0 0.0
        %882 = vmatprep.subr.mxu0 0.0
        %883 = vmatpush2.msra.mxu0 0.0
        %884 = vmatprep.mubr.f32.mxu0 0.0
        %v885 = vand.u32 %v193, 4294901760
        %886 = vmatmul.mubr.f32.gmra.mxu0 %v885
        %v887 = vpop.f32.mrf.mxu0
        %v888 = vadd.f32 %v795, %v887
        %v889 = vpop.f32.mrf.mxu0
        %890 = vmatprep.mubr.f32.mxu0 0.0
        %v891 = vand.u32 %v212, 4294901760
        %892 = vmatmul.mubr.f32.gmra.mxu0 %v891
        %v893 = vpop.f32.mrf.mxu0
        %v894 = vadd.f32 %v801, %v893
        %v895 = vpop.f32.mrf.mxu0
        %896 = vdwg.mxu0
        %v897 = vmul.f32 %v888, 0.0625
        %v898 = vmul.f32 %v894, 0.0625
        %v899 = vmul.f32 %v897, %v897
        %v900 = vsub.f32 %v898, %v899
        %v901 = vmax.f32 %v900, 0.0
        %v902 = vadd.f32 %v901, 1e-05
        %v903 = vrsqrt.pop %v902
        %vm904 = vcmask 64512
        %v906 = vsel %vm904, %v903, 0
        %908 = vmatprep.subr.mxu0 0.0
        %909 = vmatpush1.msra.mxu0 0.0
        %910 = vmatprep.subr.mxu0 0.0
        %911 = vmatpush1.msra.mxu0 0.0
        %912 = vmatprep.subr.mxu0 0.0
        %913 = vmatpush1.msra.mxu0 0.0
        %914 = vmatprep.subr.mxu0 0.0
        %915 = vmatpush1.msra.mxu0 0.0
        %916 = vmatprep.subr.mxu0 0.0
        %917 = vmatpush1.msra.mxu0 0.0
        %918 = vmatprep.subr.mxu0 0.0
        %919 = vmatpush1.msra.mxu0 0.0
        %920 = vmatprep.subr.mxu0 0.0
        %921 = vmatpush1.msra.mxu0 0.0
        %922 = vmatprep.subr.mxu0 0.0
        %923 = vmatpush1.msra.mxu0 0.0
        %924 = vmatprep.subr.mxu0 0.0
        %925 = vmatpush1.msra.mxu0 0.0
        %926 = vmatprep.subr.mxu0 0.0
        %927 = vmatpush1.msra.mxu0 0.0
        %928 = vmatprep.subr.mxu0 0.0
        %929 = vmatpush1.msra.mxu0 0.0
        %930 = vmatprep.subr.mxu0 0.0
        %931 = vmatpush1.msra.mxu0 0.0
        %932 = vmatprep.subr.mxu0 0.0
        %933 = vmatpush1.msra.mxu0 0.0
        %934 = vmatprep.subr.mxu0 0.0
        %935 = vmatpush1.msra.mxu0 0.0
        %936 = vmatprep.subr.mxu0 0.0
        %937 = vmatpush1.msra.mxu0 0.0
        %938 = vmatprep.subr.mxu0 0.0
        %v939 = vand.u32 %v211, 4294901760
        %940 = vmatpush1.msra.mxu0 %v939
        %941 = vmatprep.subr.mxu0 0.0
        %942 = vmatpush2.msra.mxu0 0.0
        %943 = vmatprep.subr.mxu0 0.0
        %944 = vmatpush2.msra.mxu0 0.0
        %945 = vmatprep.subr.mxu0 0.0
        %946 = vmatpush2.msra.mxu0 0.0
        %947 = vmatprep.subr.mxu0 0.0
        %948 = vmatpush2.msra.mxu0 0.0
        %949 = vmatprep.subr.mxu0 0.0
        %950 = vmatpush2.msra.mxu0 0.0
        %951 = vmatprep.subr.mxu0 0.0
        %952 = vmatpush2.msra.mxu0 0.0
        %953 = vmatprep.subr.mxu0 0.0
        %954 = vmatpush2.msra.mxu0 0.0
        %955 = vmatprep.subr.mxu0 0.0
        %956 = vmatpush2.msra.mxu0 0.0
        %957 = vmatprep.subr.mxu0 0.0
        %958 = vmatpush2.msra.mxu0 0.0
        %959 = vmatprep.subr.mxu0 0.0
        %960 = vmatpush2.msra.mxu0 0.0
        %961 = vmatprep.subr.mxu0 0.0
        %962 = vmatpush2.msra.mxu0 0.0
        %963 = vmatprep.subr.mxu0 0.0
        %964 = vmatpush2.msra.mxu0 0.0
        %965 = vmatprep.subr.mxu0 0.0
        %966 = vmatpush2.msra.mxu0 0.0
        %967 = vmatprep.subr.mxu0 0.0
        %968 = vmatpush2.msra.mxu0 0.0
        %969 = vmatprep.subr.mxu0 0.0
        %970 = vmatpush2.msra.mxu0 0.0
        %971 = vmatprep.subr.mxu0 0.0
        %972 = vmatpush2.msra.mxu0 0.0
        %973 = vmatprep.mubr.f32.mxu0 0.0
        %v974 = vand.u32 %v906, 4294901760
        %v975 = vsub.f32 %v906, %v974
        %v976 = vand.u32 %v975, 4294901760
        %v977 = vsub.f32 %v975, %v976
        %v978 = vand.u32 %v977, 4294901760
        %979 = vmatmul.mubr.f32.gmra.mxu0 %v978
        %v980 = vpop.f32.mrf.mxu0
        %v981 = vadd.f32 0.0, %v980
        %v982 = vpop.f32.mrf.mxu0
        %983 = vdwg.mxu0
        %984 = vmatprep.subr.mxu0 0.0
        %985 = vmatpush1.msra.mxu0 0.0
        %986 = vmatprep.subr.mxu0 0.0
        %987 = vmatpush1.msra.mxu0 0.0
        %988 = vmatprep.subr.mxu0 0.0
        %989 = vmatpush1.msra.mxu0 0.0
        %990 = vmatprep.subr.mxu0 0.0
        %991 = vmatpush1.msra.mxu0 0.0
        %992 = vmatprep.subr.mxu0 0.0
        %993 = vmatpush1.msra.mxu0 0.0
        %994 = vmatprep.subr.mxu0 0.0
        %995 = vmatpush1.msra.mxu0 0.0
        %996 = vmatprep.subr.mxu0 0.0
        %997 = vmatpush1.msra.mxu0 0.0
        %998 = vmatprep.subr.mxu0 0.0
        %999 = vmatpush1.msra.mxu0 0.0
        %1000 = vmatprep.subr.mxu0 0.0
        %1001 = vmatpush1.msra.mxu0 0.0
        %1002 = vmatprep.subr.mxu0 0.0
        %1003 = vmatpush1.msra.mxu0 0.0
        %1004 = vmatprep.subr.mxu0 0.0
        %1005 = vmatpush1.msra.mxu0 0.0
        %1006 = vmatprep.subr.mxu0 0.0
        %1007 = vmatpush1.msra.mxu0 0.0
        %1008 = vmatprep.subr.mxu0 0.0
        %1009 = vmatpush1.msra.mxu0 0.0
        %1010 = vmatprep.subr.mxu0 0.0
        %1011 = vmatpush1.msra.mxu0 0.0
        %1012 = vmatprep.subr.mxu0 0.0
        %1013 = vmatpush1.msra.mxu0 0.0
        %1014 = vmatprep.subr.mxu0 0.0
        %v1015 = vand.u32 %v211, 4294901760
        %v1016 = vsub.f32 %v211, %v1015
        %v1017 = vand.u32 %v1016, 4294901760
        %v1018 = vsub.f32 %v1016, %v1017
        %v1019 = vand.u32 %v1018, 4294901760
        %1020 = vmatpush1.msra.mxu0 %v1019
        %1021 = vmatprep.subr.mxu0 0.0
        %1022 = vmatpush2.msra.mxu0 0.0
        %1023 = vmatprep.subr.mxu0 0.0
        %1024 = vmatpush2.msra.mxu0 0.0
        %1025 = vmatprep.subr.mxu0 0.0
        %1026 = vmatpush2.msra.mxu0 0.0
        %1027 = vmatprep.subr.mxu0 0.0
        %1028 = vmatpush2.msra.mxu0 0.0
        %1029 = vmatprep.subr.mxu0 0.0
        %1030 = vmatpush2.msra.mxu0 0.0
        %1031 = vmatprep.subr.mxu0 0.0
        %1032 = vmatpush2.msra.mxu0 0.0
        %1033 = vmatprep.subr.mxu0 0.0
        %1034 = vmatpush2.msra.mxu0 0.0
        %1035 = vmatprep.subr.mxu0 0.0
        %1036 = vmatpush2.msra.mxu0 0.0
        %1037 = vmatprep.subr.mxu0 0.0
        %1038 = vmatpush2.msra.mxu0 0.0
        %1039 = vmatprep.subr.mxu0 0.0
        %1040 = vmatpush2.msra.mxu0 0.0
        %1041 = vmatprep.subr.mxu0 0.0
        %1042 = vmatpush2.msra.mxu0 0.0
        %1043 = vmatprep.subr.mxu0 0.0
        %1044 = vmatpush2.msra.mxu0 0.0
        %1045 = vmatprep.subr.mxu0 0.0
        %1046 = vmatpush2.msra.mxu0 0.0
        %1047 = vmatprep.subr.mxu0 0.0
        %1048 = vmatpush2.msra.mxu0 0.0
        %1049 = vmatprep.subr.mxu0 0.0
        %1050 = vmatpush2.msra.mxu0 0.0
        %1051 = vmatprep.subr.mxu0 0.0
        %1052 = vmatpush2.msra.mxu0 0.0
        %1053 = vmatprep.mubr.f32.mxu0 0.0
        %v1054 = vand.u32 %v906, 4294901760
        %1055 = vmatmul.mubr.f32.gmra.mxu0 %v1054
        %v1056 = vpop.f32.mrf.mxu0
        %v1057 = vadd.f32 %v981, %v1056
        %v1058 = vpop.f32.mrf.mxu0
        %1059 = vdwg.mxu0
        %1060 = vmatprep.subr.mxu0 0.0
        %1061 = vmatpush1.msra.mxu0 0.0
        %1062 = vmatprep.subr.mxu0 0.0
        %1063 = vmatpush1.msra.mxu0 0.0
        %1064 = vmatprep.subr.mxu0 0.0
        %1065 = vmatpush1.msra.mxu0 0.0
        %1066 = vmatprep.subr.mxu0 0.0
        %1067 = vmatpush1.msra.mxu0 0.0
        %1068 = vmatprep.subr.mxu0 0.0
        %1069 = vmatpush1.msra.mxu0 0.0
        %1070 = vmatprep.subr.mxu0 0.0
        %1071 = vmatpush1.msra.mxu0 0.0
        %1072 = vmatprep.subr.mxu0 0.0
        %1073 = vmatpush1.msra.mxu0 0.0
        %1074 = vmatprep.subr.mxu0 0.0
        %1075 = vmatpush1.msra.mxu0 0.0
        %1076 = vmatprep.subr.mxu0 0.0
        %1077 = vmatpush1.msra.mxu0 0.0
        %1078 = vmatprep.subr.mxu0 0.0
        %1079 = vmatpush1.msra.mxu0 0.0
        %1080 = vmatprep.subr.mxu0 0.0
        %1081 = vmatpush1.msra.mxu0 0.0
        %1082 = vmatprep.subr.mxu0 0.0
        %1083 = vmatpush1.msra.mxu0 0.0
        %1084 = vmatprep.subr.mxu0 0.0
        %1085 = vmatpush1.msra.mxu0 0.0
        %1086 = vmatprep.subr.mxu0 0.0
        %1087 = vmatpush1.msra.mxu0 0.0
        %1088 = vmatprep.subr.mxu0 0.0
        %1089 = vmatpush1.msra.mxu0 0.0
        %1090 = vmatprep.subr.mxu0 0.0
        %v1091 = vand.u32 %v211, 4294901760
        %v1092 = vsub.f32 %v211, %v1091
        %1093 = vmatpush1.msra.mxu0 %v1092
        %1094 = vmatprep.subr.mxu0 0.0
        %1095 = vmatpush2.msra.mxu0 0.0
        %1096 = vmatprep.subr.mxu0 0.0
        %1097 = vmatpush2.msra.mxu0 0.0
        %1098 = vmatprep.subr.mxu0 0.0
        %1099 = vmatpush2.msra.mxu0 0.0
        %1100 = vmatprep.subr.mxu0 0.0
        %1101 = vmatpush2.msra.mxu0 0.0
        %1102 = vmatprep.subr.mxu0 0.0
        %1103 = vmatpush2.msra.mxu0 0.0
        %1104 = vmatprep.subr.mxu0 0.0
        %1105 = vmatpush2.msra.mxu0 0.0
        %1106 = vmatprep.subr.mxu0 0.0
        %1107 = vmatpush2.msra.mxu0 0.0
        %1108 = vmatprep.subr.mxu0 0.0
        %1109 = vmatpush2.msra.mxu0 0.0
        %1110 = vmatprep.subr.mxu0 0.0
        %1111 = vmatpush2.msra.mxu0 0.0
        %1112 = vmatprep.subr.mxu0 0.0
        %1113 = vmatpush2.msra.mxu0 0.0
        %1114 = vmatprep.subr.mxu0 0.0
        %1115 = vmatpush2.msra.mxu0 0.0
        %1116 = vmatprep.subr.mxu0 0.0
        %1117 = vmatpush2.msra.mxu0 0.0
        %1118 = vmatprep.subr.mxu0 0.0
        %1119 = vmatpush2.msra.mxu0 0.0
        %1120 = vmatprep.subr.mxu0 0.0
        %1121 = vmatpush2.msra.mxu0 0.0
        %1122 = vmatprep.subr.mxu0 0.0
        %1123 = vmatpush2.msra.mxu0 0.0
        %1124 = vmatprep.subr.mxu0 0.0
        %1125 = vmatpush2.msra.mxu0 0.0
        %1126 = vmatprep.mubr.f32.mxu0 0.0
        %v1127 = vand.u32 %v906, 4294901760
        %v1128 = vsub.f32 %v906, %v1127
        %1129 = vmatmul.mubr.f32.gmra.mxu0 %v1128
        %v1130 = vpop.f32.mrf.mxu0
        %v1131 = vadd.f32 %v1057, %v1130
        %v1132 = vpop.f32.mrf.mxu0
        %1133 = vdwg.mxu0
        %1134 = vmatprep.subr.mxu0 0.0
        %1135 = vmatpush1.msra.mxu0 0.0
        %1136 = vmatprep.subr.mxu0 0.0
        %1137 = vmatpush1.msra.mxu0 0.0
        %1138 = vmatprep.subr.mxu0 0.0
        %1139 = vmatpush1.msra.mxu0 0.0
        %1140 = vmatprep.subr.mxu0 0.0
        %1141 = vmatpush1.msra.mxu0 0.0
        %1142 = vmatprep.subr.mxu0 0.0
        %1143 = vmatpush1.msra.mxu0 0.0
        %1144 = vmatprep.subr.mxu0 0.0
        %1145 = vmatpush1.msra.mxu0 0.0
        %1146 = vmatprep.subr.mxu0 0.0
        %1147 = vmatpush1.msra.mxu0 0.0
        %1148 = vmatprep.subr.mxu0 0.0
        %1149 = vmatpush1.msra.mxu0 0.0
        %1150 = vmatprep.subr.mxu0 0.0
        %1151 = vmatpush1.msra.mxu0 0.0
        %1152 = vmatprep.subr.mxu0 0.0
        %1153 = vmatpush1.msra.mxu0 0.0
        %1154 = vmatprep.subr.mxu0 0.0
        %1155 = vmatpush1.msra.mxu0 0.0
        %1156 = vmatprep.subr.mxu0 0.0
        %1157 = vmatpush1.msra.mxu0 0.0
        %1158 = vmatprep.subr.mxu0 0.0
        %1159 = vmatpush1.msra.mxu0 0.0
        %1160 = vmatprep.subr.mxu0 0.0
        %1161 = vmatpush1.msra.mxu0 0.0
        %1162 = vmatprep.subr.mxu0 0.0
        %1163 = vmatpush1.msra.mxu0 0.0
        %1164 = vmatprep.subr.mxu0 0.0
        %v1165 = vand.u32 %v211, 4294901760
        %1166 = vmatpush1.msra.mxu0 %v1165
        %1167 = vmatprep.subr.mxu0 0.0
        %1168 = vmatpush2.msra.mxu0 0.0
        %1169 = vmatprep.subr.mxu0 0.0
        %1170 = vmatpush2.msra.mxu0 0.0
        %1171 = vmatprep.subr.mxu0 0.0
        %1172 = vmatpush2.msra.mxu0 0.0
        %1173 = vmatprep.subr.mxu0 0.0
        %1174 = vmatpush2.msra.mxu0 0.0
        %1175 = vmatprep.subr.mxu0 0.0
        %1176 = vmatpush2.msra.mxu0 0.0
        %1177 = vmatprep.subr.mxu0 0.0
        %1178 = vmatpush2.msra.mxu0 0.0
        %1179 = vmatprep.subr.mxu0 0.0
        %1180 = vmatpush2.msra.mxu0 0.0
        %1181 = vmatprep.subr.mxu0 0.0
        %1182 = vmatpush2.msra.mxu0 0.0
        %1183 = vmatprep.subr.mxu0 0.0
        %1184 = vmatpush2.msra.mxu0 0.0
        %1185 = vmatprep.subr.mxu0 0.0
        %1186 = vmatpush2.msra.mxu0 0.0
        %1187 = vmatprep.subr.mxu0 0.0
        %1188 = vmatpush2.msra.mxu0 0.0
        %1189 = vmatprep.subr.mxu0 0.0
        %1190 = vmatpush2.msra.mxu0 0.0
        %1191 = vmatprep.subr.mxu0 0.0
        %1192 = vmatpush2.msra.mxu0 0.0
        %1193 = vmatprep.subr.mxu0 0.0
        %1194 = vmatpush2.msra.mxu0 0.0
        %1195 = vmatprep.subr.mxu0 0.0
        %1196 = vmatpush2.msra.mxu0 0.0
        %1197 = vmatprep.subr.mxu0 0.0
        %1198 = vmatpush2.msra.mxu0 0.0
        %1199 = vmatprep.mubr.f32.mxu0 0.0
        %v1200 = vand.u32 %v906, 4294901760
        %v1201 = vsub.f32 %v906, %v1200
        %v1202 = vand.u32 %v1201, 4294901760
        %1203 = vmatmul.mubr.f32.gmra.mxu0 %v1202
        %v1204 = vpop.f32.mrf.mxu0
        %v1205 = vadd.f32 %v1131, %v1204
        %v1206 = vpop.f32.mrf.mxu0
        %1207 = vdwg.mxu0
        %1208 = vmatprep.subr.mxu0 0.0
        %1209 = vmatpush1.msra.mxu0 0.0
        %1210 = vmatprep.subr.mxu0 0.0
        %1211 = vmatpush1.msra.mxu0 0.0
        %1212 = vmatprep.subr.mxu0 0.0
        %1213 = vmatpush1.msra.mxu0 0.0
        %1214 = vmatprep.subr.mxu0 0.0
        %1215 = vmatpush1.msra.mxu0 0.0
        %1216 = vmatprep.subr.mxu0 0.0
        %1217 = vmatpush1.msra.mxu0 0.0
        %1218 = vmatprep.subr.mxu0 0.0
        %1219 = vmatpush1.msra.mxu0 0.0
        %1220 = vmatprep.subr.mxu0 0.0
        %1221 = vmatpush1.msra.mxu0 0.0
        %1222 = vmatprep.subr.mxu0 0.0
        %1223 = vmatpush1.msra.mxu0 0.0
        %1224 = vmatprep.subr.mxu0 0.0
        %1225 = vmatpush1.msra.mxu0 0.0
        %1226 = vmatprep.subr.mxu0 0.0
        %1227 = vmatpush1.msra.mxu0 0.0
        %1228 = vmatprep.subr.mxu0 0.0
        %1229 = vmatpush1.msra.mxu0 0.0
        %1230 = vmatprep.subr.mxu0 0.0
        %1231 = vmatpush1.msra.mxu0 0.0
        %1232 = vmatprep.subr.mxu0 0.0
        %1233 = vmatpush1.msra.mxu0 0.0
        %1234 = vmatprep.subr.mxu0 0.0
        %1235 = vmatpush1.msra.mxu0 0.0
        %1236 = vmatprep.subr.mxu0 0.0
        %1237 = vmatpush1.msra.mxu0 0.0
        %1238 = vmatprep.subr.mxu0 0.0
        %v1239 = vand.u32 %v211, 4294901760
        %v1240 = vsub.f32 %v211, %v1239
        %v1241 = vand.u32 %v1240, 4294901760
        %1242 = vmatpush1.msra.mxu0 %v1241
        %1243 = vmatprep.subr.mxu0 0.0
        %1244 = vmatpush2.msra.mxu0 0.0
        %1245 = vmatprep.subr.mxu0 0.0
        %1246 = vmatpush2.msra.mxu0 0.0
        %1247 = vmatprep.subr.mxu0 0.0
        %1248 = vmatpush2.msra.mxu0 0.0
        %1249 = vmatprep.subr.mxu0 0.0
        %1250 = vmatpush2.msra.mxu0 0.0
        %1251 = vmatprep.subr.mxu0 0.0
        %1252 = vmatpush2.msra.mxu0 0.0
        %1253 = vmatprep.subr.mxu0 0.0
        %1254 = vmatpush2.msra.mxu0 0.0
        %1255 = vmatprep.subr.mxu0 0.0
        %1256 = vmatpush2.msra.mxu0 0.0
        %1257 = vmatprep.subr.mxu0 0.0
        %1258 = vmatpush2.msra.mxu0 0.0
        %1259 = vmatprep.subr.mxu0 0.0
        %1260 = vmatpush2.msra.mxu0 0.0
        %1261 = vmatprep.subr.mxu0 0.0
        %1262 = vmatpush2.msra.mxu0 0.0
        %1263 = vmatprep.subr.mxu0 0.0
        %1264 = vmatpush2.msra.mxu0 0.0
        %1265 = vmatprep.subr.mxu0 0.0
        %1266 = vmatpush2.msra.mxu0 0.0
        %1267 = vmatprep.subr.mxu0 0.0
        %1268 = vmatpush2.msra.mxu0 0.0
        %1269 = vmatprep.subr.mxu0 0.0
        %1270 = vmatpush2.msra.mxu0 0.0
        %1271 = vmatprep.subr.mxu0 0.0
        %1272 = vmatpush2.msra.mxu0 0.0
        %1273 = vmatprep.subr.mxu0 0.0
        %1274 = vmatpush2.msra.mxu0 0.0
        %1275 = vmatprep.mubr.f32.mxu0 0.0
        %v1276 = vand.u32 %v906, 4294901760
        %1277 = vmatmul.mubr.f32.gmra.mxu0 %v1276
        %v1278 = vpop.f32.mrf.mxu0
        %v1279 = vadd.f32 %v1205, %v1278
        %v1280 = vpop.f32.mrf.mxu0
        %1281 = vdwg.mxu0
        %1282 = vmatprep.subr.mxu0 0.0
        %1283 = vmatpush1.msra.mxu0 0.0
        %1284 = vmatprep.subr.mxu0 0.0
        %1285 = vmatpush1.msra.mxu0 0.0
        %1286 = vmatprep.subr.mxu0 0.0
        %1287 = vmatpush1.msra.mxu0 0.0
        %1288 = vmatprep.subr.mxu0 0.0
        %1289 = vmatpush1.msra.mxu0 0.0
        %1290 = vmatprep.subr.mxu0 0.0
        %1291 = vmatpush1.msra.mxu0 0.0
        %1292 = vmatprep.subr.mxu0 0.0
        %1293 = vmatpush1.msra.mxu0 0.0
        %1294 = vmatprep.subr.mxu0 0.0
        %1295 = vmatpush1.msra.mxu0 0.0
        %1296 = vmatprep.subr.mxu0 0.0
        %1297 = vmatpush1.msra.mxu0 0.0
        %1298 = vmatprep.subr.mxu0 0.0
        %1299 = vmatpush1.msra.mxu0 0.0
        %1300 = vmatprep.subr.mxu0 0.0
        %1301 = vmatpush1.msra.mxu0 0.0
        %1302 = vmatprep.subr.mxu0 0.0
        %1303 = vmatpush1.msra.mxu0 0.0
        %1304 = vmatprep.subr.mxu0 0.0
        %1305 = vmatpush1.msra.mxu0 0.0
        %1306 = vmatprep.subr.mxu0 0.0
        %1307 = vmatpush1.msra.mxu0 0.0
        %1308 = vmatprep.subr.mxu0 0.0
        %1309 = vmatpush1.msra.mxu0 0.0
        %1310 = vmatprep.subr.mxu0 0.0
        %1311 = vmatpush1.msra.mxu0 0.0
        %1312 = vmatprep.subr.mxu0 0.0
        %v1313 = vand.u32 %v211, 4294901760
        %1314 = vmatpush1.msra.mxu0 %v1313
        %1315 = vmatprep.subr.mxu0 0.0
        %1316 = vmatpush2.msra.mxu0 0.0
        %1317 = vmatprep.subr.mxu0 0.0
        %1318 = vmatpush2.msra.mxu0 0.0
        %1319 = vmatprep.subr.mxu0 0.0
        %1320 = vmatpush2.msra.mxu0 0.0
        %1321 = vmatprep.subr.mxu0 0.0
        %1322 = vmatpush2.msra.mxu0 0.0
        %1323 = vmatprep.subr.mxu0 0.0
        %1324 = vmatpush2.msra.mxu0 0.0
        %1325 = vmatprep.subr.mxu0 0.0
        %1326 = vmatpush2.msra.mxu0 0.0
        %1327 = vmatprep.subr.mxu0 0.0
        %1328 = vmatpush2.msra.mxu0 0.0
        %1329 = vmatprep.subr.mxu0 0.0
        %1330 = vmatpush2.msra.mxu0 0.0
        %1331 = vmatprep.subr.mxu0 0.0
        %1332 = vmatpush2.msra.mxu0 0.0
        %1333 = vmatprep.subr.mxu0 0.0
        %1334 = vmatpush2.msra.mxu0 0.0
        %1335 = vmatprep.subr.mxu0 0.0
        %1336 = vmatpush2.msra.mxu0 0.0
        %1337 = vmatprep.subr.mxu0 0.0
        %1338 = vmatpush2.msra.mxu0 0.0
        %1339 = vmatprep.subr.mxu0 0.0
        %1340 = vmatpush2.msra.mxu0 0.0
        %1341 = vmatprep.subr.mxu0 0.0
        %1342 = vmatpush2.msra.mxu0 0.0
        %1343 = vmatprep.subr.mxu0 0.0
        %1344 = vmatpush2.msra.mxu0 0.0
        %1345 = vmatprep.subr.mxu0 0.0
        %1346 = vmatpush2.msra.mxu0 0.0
        %1347 = vmatprep.mubr.f32.mxu0 0.0
        %v1348 = vand.u32 %v906, 4294901760
        %1349 = vmatmul.mubr.f32.gmra.mxu0 %v1348
        %v1350 = vpop.f32.mrf.mxu0
        %v1351 = vadd.f32 %v1279, %v1350
        %v1352 = vpop.f32.mrf.mxu0
        %1353 = vdwg.mxu0
        %v1354 = vmul.f32 %v193, %v1351
        %v1356 = vlaneseq
        %v1357 = vshrl.u32 %v1356, 7
        %v1358 = vsub.s32 0, %v1357
        %v1359 = vrot.slane %v194, %v1358
        %v1361 = vmul.f32 %v1354, %v1359
        %1362 = vst [vmem:[%s188] sm:$0xff] %v1361
        %s1363 = sand.u32 %s115, 1
        %s1364 = scalar_lea.sflag [#allocation3], %s1363
        %s1365 = sand.u32 %s115, 1
        %s1366 = smul.addr %s1365, 8
        %s1367 = scalar_lea.vmem [#allocation2], %s1366
        // Predicated region
        $region37: #{tpu_custom_call.1} parent=35 // pred_check
          %p1368 = pneg %p125
        $region38: #{tpu_custom_call.1} parent=35 // pred_check_branch
          %1370 = sbr.rel (%p1368) target = $region40
        $region39: #{tpu_custom_call.1} parent=35 // pred_region
          %s1372 = ssub.s32 128, 128
          %1373 = vsyncadd %s1364, %s1372
          %s1374 = smul.addr %s18, 128
          %s1375 = scalar_lea.hbm %s4, %s1374
          %s1377 = sshll.u32 %s1367, 4
          %s1378 = int_to_ptr.vmem [resolvable:$true] %s1377
          %1380 = dma.vmem_to_hbm [thread:$0]  %s1378, 128, %s1375, %s1364
        $region40: #{tpu_custom_call.1} parent=35 // pred_fallthru
          _
      $region36: #{tpu_custom_call.1} parent=5 // pred_fallthru
        _
      %p1381 = scmp.le.s32.totalorder 2, %s13
      // Predicated region
      $region41: #{tpu_custom_call.1} parent=5 // pred_check
        %p1382 = pneg %p1381
      $region42: #{tpu_custom_call.1} parent=5 // pred_check_branch
        %1384 = sbr.rel (%p1382) target = $region44
      $region43: #{tpu_custom_call.1} parent=5 // pred_region
        %s1385 = ssub.s32 %s13, 2
        // Predicated region
        $region45: #{tpu_custom_call.1} parent=43 // pred_check
          %p1386 = pneg %p131
        $region46: #{tpu_custom_call.1} parent=43 // pred_check_branch
          %1388 = sbr.rel (%p1386) target = $region48
        $region47: #{tpu_custom_call.1} parent=43 // pred_region
          %s1389 = sand.u32 %s116, 1
          %s1390 = scalar_lea.sflag [#allocation3], %s1389
          %s1391 = sand.u32 %s116, 1
          %s1392 = smul.addr %s1391, 8
          %s1393 = scalar_lea.vmem [#allocation2], %s1392
          %1394 = dma.done %s1390, 128
        $region48: #{tpu_custom_call.1} parent=43 // pred_fallthru
          _
      $region44: #{tpu_custom_call.1} parent=5 // pred_fallthru
        _
    $region6: #{tpu_custom_call.1} parent=1 // loop_footer
      %s17 = sadd.s32 1, %s13
    $region7: #{tpu_custom_call.1} parent=1 // loop_footer_branch
      %12 = sbr.rel target = $region3
    $region8: #{tpu_custom_call.1} parent=1 // loop_exit
      _
    %1395 = vsyncpa [#allocation3], 1
    %s1396 = scalar_lea.sflag [#allocation3], 1
    %1397 = vsyncpa %s1396, 1

</llo_original>
